<compile_context>
chip_gen: v5e
topology: v5e:2x2
jax: 0.10.0
libtpu: 0.0.40
codegen_flags: <defaults>
</compile_context>

<pallas_src>
import math
from functools import partial

import jax
import jax.numpy as jnp
from jax.experimental import pallas as pl
from jax.experimental.pallas import tpu as pltpu


def _gcn_kernel(x_ref, w_ref, abd_ref, b_ref, o_ref, *, K, C_out, compute_dtype):
    """One (batch, T-tile) block.  All operands/results are lane-dense (last dim
    tv = t_tile*V_pad, a multiple of 128); no lane-layout changes inside."""
    # x_ref:   (1, C_in, tv)   input block, HBM dtype; cast in VMEM (no wrapper pass)
    # w_ref:   (K*C_out, C_in) 1x1-conv weight
    # abd_ref: (K, tv, tv)     block-diagonal adjacency, A_bd[k] = I_t (x) A[k]
    # b_ref:   (C_out, tv)     folded bias tile (f32)
    # o_ref:   (1, C_out, tv)  lane-dense output block
    x = x_ref[0].astype(compute_dtype)                               # (C_in, tv)

    # Stage 1: 1x1 conv as ONE lane-dense MXU matmul, f32 accumulation.
    y = jnp.dot(w_ref[...], x, preferred_element_type=jnp.float32)   # (K*C_out, tv)
    # NOTE: in bf16 mode this rounds the stage-1 result once before stage 2.
    y = y.astype(compute_dtype)

    # Stage 2: graph contraction against the block-diagonal adjacency.  The row
    # slices k*C_out:(k+1)*C_out are static sublane slices (no lane relayout) and
    # each dot reads/writes the store layout directly.  K is small and static.
    acc = b_ref[...]                                                 # (C_out, tv) f32
    for k in range(K):
        acc = acc + jnp.dot(y[k * C_out:(k + 1) * C_out, :], abd_ref[k],
                            preferred_element_type=jnp.float32)
    o_ref[0] = acc.astype(o_ref.dtype)


def _ceil_to(x, m):
    return -(-x // m) * m


def _pick_tiling(T, V, max_lanes):
    """Return (v_pad, t_tile, n_t, T_pad): pad V to a 128-friendly width, pick the T
    tile so tv = t_tile*v_pad is a multiple of 128 (unmasked lane-dense stores),
    tv <= max_lanes, and there are >= 2 T-steps whenever T allows."""
    if 128 % V == 0:
        v_pad = V
    elif V <= 128:
        v_pad = 1 << (V - 1).bit_length()          # 25 -> 32, 18 -> 32, 100 -> 128
    else:
        v_pad = _ceil_to(V, 128)
    base_t = math.lcm(v_pad, 128) // v_pad          # smallest t with t*v_pad % 128 == 0
    t_max = max(base_t, (max_lanes // (base_t * v_pad)) * base_t)
    # Prefer >= 2 tiles along T (pipelining / v7x dual-TC) without huge T padding.
    half_t = _ceil_to((T + 1) // 2, base_t)
    t_tile = max(base_t, min(t_max, half_t))
    n_t = -(-T // t_tile)
    return v_pad, t_tile, n_t, n_t * t_tile


def conv_temporal_graphical(x, A, weight, bias, *, max_lanes=512,
                            compute_dtype=jnp.float32):
    """Pallas ConvTemporalGraphical.forward (module defaults: 1x1 temporal kernel).

    x:      (N, C_in, T, V)
    A:      (K, V, V)
    weight: (K*C_out, C_in)  -- PyTorch conv weight with the 1x1 spatial dims squeezed
    bias:   (K*C_out,)
    returns (out, A) with out: (N, C_out, T, V)
    """
    # TODO(synk): general t_kernel_size/t_stride/t_padding/t_dilation temporal conv is
    # not implemented; only the module defaults (1x1 temporal kernel) are supported.
    N, C_in, T, V = x.shape
    K = A.shape[0]
    assert A.shape == (K, V, V)
    assert weight.ndim == 2 and weight.shape[1] == C_in and weight.shape[0] % K == 0
    C_out = weight.shape[0] // K
    assert bias.shape == (K * C_out,)

    v_pad, t_tile, n_t, T_pad = _pick_tiling(T, V, max_lanes)
    tv = t_tile * v_pad
    out_dtype = x.dtype

    # Zero-pad V (and T) to the lane-friendly tile; numerically exact: padded v-rows
    # of A are zero, padded w-columns / t-rows are sliced off below.
    x_p = x
    if v_pad != V or T_pad != T:
        x_p = jnp.pad(x, ((0, 0), (0, 0), (0, T_pad - T), (0, v_pad - V)))
    x_flat = x_p.reshape(N, C_in, T_pad * v_pad)        # metadata-only; NO dtype cast

    a_p = jnp.pad(A.astype(jnp.float32), ((0, 0), (0, v_pad - V), (0, v_pad - V)))
    # Block-diagonal adjacency: A_bd[k] = I_{t_tile} (x) A_p[k], shape (K, tv, tv).
    eye = jnp.eye(t_tile, dtype=jnp.float32)
    a_bd = jnp.einsum('st,kvw->ksvtw', eye, a_p).reshape(K, tv, tv).astype(compute_dtype)

    # Folded bias: bias_out[c, w] = sum_k b[k,c] * sum_v A[k,v,w], tiled over t.
    b_out = jnp.einsum('kc,kw->cw', bias.reshape(K, C_out).astype(jnp.float32),
                       a_p.sum(axis=1))                 # (C_out, v_pad)
    b_full = jnp.tile(b_out, (1, t_tile))               # (C_out, tv), f32

    w_c = weight.astype(compute_dtype)                  # tiny parameter cast

    # VMEM budget from actual block sizes (double-buffered in/out + invariant operands
    # + live f32 intermediates), capped at v7x's 64 MiB physical VMEM.
    xsz = jnp.dtype(x.dtype).itemsize
    osz = jnp.dtype(out_dtype).itemsize
    csz = jnp.dtype(compute_dtype).itemsize
    needed = (2 * C_in * tv * xsz + 2 * C_out * tv * osz
              + 2 * K * C_out * C_in * csz + 2 * K * tv * tv * csz
              + 2 * C_out * tv * 4
              + (K * C_out + 2 * C_out) * tv * 4 + C_in * tv * csz)
    vmem_limit = int(min(max(32 * 2**20, 1.5 * needed), 64 * 2**20))

    kernel = partial(_gcn_kernel, K=K, C_out=C_out, compute_dtype=compute_dtype)

    out_flat = pl.pallas_call(
        kernel,
        out_shape=jax.ShapeDtypeStruct((N, C_out, T_pad * v_pad), out_dtype),
        grid_spec=pltpu.PrefetchScalarGridSpec(
            num_scalar_prefetch=0,
            grid=(N, n_t),
            in_specs=[
                pl.BlockSpec((1, C_in, tv), lambda n, j: (n, 0, j)),
                pl.BlockSpec((K * C_out, C_in), lambda n, j: (0, 0)),
                pl.BlockSpec((K, tv, tv), lambda n, j: (0, 0, 0)),
                pl.BlockSpec((C_out, tv), lambda n, j: (0, 0)),
            ],
            out_specs=pl.BlockSpec((1, C_out, tv), lambda n, j: (n, 0, j)),
        ),
        compiler_params=pltpu.CompilerParams(
            dimension_semantics=("parallel", "parallel"),
            vmem_limit_bytes=vmem_limit),
    )(x_flat, w_c, a_bd, b_full)

    out = out_flat.reshape(N, C_out, T_pad, v_pad)[:, :, :T, :V]
    return out, A


def _reference(x, A, weight, bias):
    """Pure-JAX reference matching the PyTorch forward (full f32 precision)."""
    N, C_in, T, V = x.shape
    K = A.shape[0]
    C_out = weight.shape[0] // K
    y = jnp.einsum('oc,nctv->notv', weight, x,
                   precision=jax.lax.Precision.HIGHEST) + bias[None, :, None, None]
    y = y.reshape(N, K, C_out, T, V)
    return jnp.einsum('nkctv,kvw->nctw', y, A, precision=jax.lax.Precision.HIGHEST)


if __name__ == "__main__":
    def _quantize(v, step):
        # Coarse, bf16-exact grids so f32 / bf16 paths compare tightly vs reference.
        return jnp.round(v / step) * step

    keys = jax.random.split(jax.random.PRNGKey(0), 8)

    # ---- Test 1: lane-aligned V=16 (no padding), f32 and bf16 compute paths ----
    N, C_in, C_out, K, T, V = 2, 8, 16, 3, 32, 16
    x = _quantize(jax.random.normal(keys[0], (N, C_in, T, V), jnp.float32), 0.25)
    A = _quantize(jax.random.normal(keys[1], (K, V, V), jnp.float32), 0.25)
    weight = _quantize(jax.random.normal(keys[2], (K * C_out, C_in), jnp.float32) * 0.25, 1 / 16)
    bias = _quantize(jax.random.normal(keys[3], (K * C_out,), jnp.float32) * 0.25, 1 / 16)

    ref = _reference(x, A, weight, bias)

    out, A_out = conv_temporal_graphical(x, A, weight, bias)
    out = jax.block_until_ready(out)
    assert out.shape == (N, C_out, T, V)
    assert A_out.shape == (K, V, V)
    assert jnp.allclose(out, ref, atol=1e-3, rtol=1e-3), "f32 mismatch vs reference"

    out_bf16, _ = conv_temporal_graphical(x, A, weight, bias, compute_dtype=jnp.bfloat16)
    out_bf16 = jax.block_until_ready(out_bf16)
    assert jnp.allclose(out_bf16, ref, atol=5e-2, rtol=2e-2), "bf16 mismatch vs reference"

    # ---- Test 2: V=25 skeleton (exercises V/T padding + lane-dense tiling) ----
    N2, C_in2, C_out2, K2, T2, V2 = 1, 4, 8, 2, 20, 25
    x2 = _quantize(jax.random.normal(keys[4], (N2, C_in2, T2, V2), jnp.float32), 0.25)
    A2 = _quantize(jax.random.normal(keys[5], (K2, V2, V2), jnp.float32), 0.25)
    w2 = _quantize(jax.random.normal(keys[6], (K2 * C_out2, C_in2), jnp.float32) * 0.25, 1 / 16)
    b2 = _quantize(jax.random.normal(keys[7], (K2 * C_out2,), jnp.float32) * 0.25, 1 / 16)
    ref2 = _reference(x2, A2, w2, b2)
    out2, _ = conv_temporal_graphical(x2, A2, w2, b2)
    out2 = jax.block_until_ready(out2)
    assert out2.shape == (N2, C_out2, T2, V2)
    assert jnp.allclose(out2, ref2, atol=1e-3, rtol=1e-3), "padded-V mismatch vs reference"

    print("KERNEL_OK")
</pallas_src>

<mosaic_0001>
module attributes {stable_mosaic.version = 11 : i64} {
  func.func @_gcn_kernel(%arg0: i32, %arg1: i32, %arg2: memref<1x8x256xf32, #tpu.memory_space<vmem>>, %arg3: memref<48x8xf32, #tpu.memory_space<vmem>>, %arg4: memref<3x256x256xf32, #tpu.memory_space<vmem>>, %arg5: memref<16x256xf32, #tpu.memory_space<vmem>>, %arg6: memref<1x16x256xf32, #tpu.memory_space<vmem>>) attributes {dimension_semantics = [#tpu.dimension_semantics<parallel>, #tpu.dimension_semantics<parallel>], iteration_bounds = array<i64: 2, 2>, scalar_prefetch = 0 : i64, scratch_operands = 0 : i64, tpu.core_type = #tpu.core_type<tc>, window_params = [{transform_indices = @transform_0, window_bounds = array<i64: 1, 8, 256>}, {pipeline_mode = #tpu.pipeline_mode<synchronous>, transform_indices = @transform_1, window_bounds = array<i64: 48, 8>}, {pipeline_mode = #tpu.pipeline_mode<synchronous>, transform_indices = @transform_2, window_bounds = array<i64: 3, 256, 256>}, {pipeline_mode = #tpu.pipeline_mode<synchronous>, transform_indices = @transform_3, window_bounds = array<i64: 16, 256>}, {transform_indices = @transform_4, window_bounds = array<i64: 1, 16, 256>}]} {
    %c0 = arith.constant 0 : index
    %c0_0 = arith.constant 0 : index
    %c0_1 = arith.constant 0 : index
    %0 = vector.load %arg2[%c0, %c0_0, %c0_1] : memref<1x8x256xf32, #tpu.memory_space<vmem>>, vector<1x8x256xf32>
    %1 = vector.shape_cast %0 : vector<1x8x256xf32> to vector<8x256xf32>
    %c0_2 = arith.constant 0 : index
    %c0_3 = arith.constant 0 : index
    %2 = vector.load %arg3[%c0_2, %c0_3] : memref<48x8xf32, #tpu.memory_space<vmem>>, vector<48x8xf32>
    %cst = arith.constant dense<0.000000e+00> : vector<48x256xf32>
    %3 = tpu.matmul %2, %1, %cst {dimension_numbers = #tpu.dot_dimension_numbers<[1], [0], [0], [1], [0, 0, 1, 1], [], []>} : vector<48x8xf32>, vector<8x256xf32>, vector<48x256xf32> -> vector<48x256xf32>
    %c0_4 = arith.constant 0 : index
    %c0_5 = arith.constant 0 : index
    %4 = vector.load %arg5[%c0_4, %c0_5] : memref<16x256xf32, #tpu.memory_space<vmem>>, vector<16x256xf32>
    %5 = vector.extract_strided_slice %3 {offsets = [0, 0], sizes = [16, 256], strides = [1, 1]} : vector<48x256xf32> to vector<16x256xf32>
    %c0_6 = arith.constant 0 : index
    %c0_7 = arith.constant 0 : index
    %c0_8 = arith.constant 0 : index
    %6 = vector.load %arg4[%c0_6, %c0_7, %c0_8] : memref<3x256x256xf32, #tpu.memory_space<vmem>>, vector<1x256x256xf32>
    %7 = vector.shape_cast %6 : vector<1x256x256xf32> to vector<256x256xf32>
    %cst_9 = arith.constant dense<0.000000e+00> : vector<16x256xf32>
    %8 = tpu.matmul %5, %7, %cst_9 {dimension_numbers = #tpu.dot_dimension_numbers<[1], [0], [0], [1], [0, 0, 1, 1], [], []>} : vector<16x256xf32>, vector<256x256xf32>, vector<16x256xf32> -> vector<16x256xf32>
    %9 = arith.addf %4, %8 : vector<16x256xf32>
    %10 = vector.extract_strided_slice %3 {offsets = [16, 0], sizes = [16, 256], strides = [1, 1]} : vector<48x256xf32> to vector<16x256xf32>
    %c1 = arith.constant 1 : index
    %c0_10 = arith.constant 0 : index
    %c0_11 = arith.constant 0 : index
    %11 = vector.load %arg4[%c1, %c0_10, %c0_11] : memref<3x256x256xf32, #tpu.memory_space<vmem>>, vector<1x256x256xf32>
    %12 = vector.shape_cast %11 : vector<1x256x256xf32> to vector<256x256xf32>
    %cst_12 = arith.constant dense<0.000000e+00> : vector<16x256xf32>
    %13 = tpu.matmul %10, %12, %cst_12 {dimension_numbers = #tpu.dot_dimension_numbers<[1], [0], [0], [1], [0, 0, 1, 1], [], []>} : vector<16x256xf32>, vector<256x256xf32>, vector<16x256xf32> -> vector<16x256xf32>
    %14 = arith.addf %9, %13 : vector<16x256xf32>
    %15 = vector.extract_strided_slice %3 {offsets = [32, 0], sizes = [16, 256], strides = [1, 1]} : vector<48x256xf32> to vector<16x256xf32>
    %c2 = arith.constant 2 : index
    %c0_13 = arith.constant 0 : index
    %c0_14 = arith.constant 0 : index
    %16 = vector.load %arg4[%c2, %c0_13, %c0_14] : memref<3x256x256xf32, #tpu.memory_space<vmem>>, vector<1x256x256xf32>
    %17 = vector.shape_cast %16 : vector<1x256x256xf32> to vector<256x256xf32>
    %cst_15 = arith.constant dense<0.000000e+00> : vector<16x256xf32>
    %18 = tpu.matmul %15, %17, %cst_15 {dimension_numbers = #tpu.dot_dimension_numbers<[1], [0], [0], [1], [0, 0, 1, 1], [], []>} : vector<16x256xf32>, vector<256x256xf32>, vector<16x256xf32> -> vector<16x256xf32>
    %19 = arith.addf %14, %18 : vector<16x256xf32>
    %c0_16 = arith.constant 0 : index
    %c0_17 = arith.constant 0 : index
    %c0_18 = arith.constant 0 : index
    %20 = vector.load %arg6[%c0_16, %c0_17, %c0_18] : memref<1x16x256xf32, #tpu.memory_space<vmem>>, vector<1x16x256xf32>
    %21 = vector.shape_cast %20 : vector<1x16x256xf32> to vector<16x256xf32>
    %22 = vector.shape_cast %19 : vector<16x256xf32> to vector<1x16x256xf32>
    tpu.vector_store %arg6[%c0_16, %c0_17, %c0_18], %22 {strides = array<i32>} : memref<1x16x256xf32, #tpu.memory_space<vmem>>, vector<1x16x256xf32>,
    return
  }
  func.func @transform_0(%arg0: i32, %arg1: i32) -> (i32, i32, i32) {
    %c0_i32 = arith.constant 0 : i32
    %c0_i32_0 = arith.constant 0 : i32
    return %arg0, %c0_i32, %arg1 : i32, i32, i32
  }
  func.func @transform_1(%arg0: i32, %arg1: i32) -> (i32, i32) {
    %c0_i32 = arith.constant 0 : i32
    %c0_i32_0 = arith.constant 0 : i32
    %c0_i32_1 = arith.constant 0 : i32
    return %c0_i32, %c0_i32_0 : i32, i32
  }
  func.func @transform_2(%arg0: i32, %arg1: i32) -> (i32, i32, i32) {
    %c0_i32 = arith.constant 0 : i32
    %c0_i32_0 = arith.constant 0 : i32
    %c0_i32_1 = arith.constant 0 : i32
    %c0_i32_2 = arith.constant 0 : i32
    return %c0_i32, %c0_i32_0, %c0_i32_1 : i32, i32, i32
  }
  func.func @transform_3(%arg0: i32, %arg1: i32) -> (i32, i32) {
    %c0_i32 = arith.constant 0 : i32
    %c0_i32_0 = arith.constant 0 : i32
    %c0_i32_1 = arith.constant 0 : i32
    return %c0_i32, %c0_i32_0 : i32, i32
  }
  func.func @transform_4(%arg0: i32, %arg1: i32) -> (i32, i32, i32) {
    %c0_i32 = arith.constant 0 : i32
    %c0_i32_0 = arith.constant 0 : i32
    return %arg0, %c0_i32, %arg1 : i32, i32, i32
  }
}

</mosaic_0001>

<llo_original>
// kernel: tpu_custom_call.1
$region0: #{tpu_custom_call.1}
  #allocation0 [shape = 'u32[]', space=smem, size = 0x4, offset = 0x4, fixed_abs, tag = 'smem constant byte address 0x4 - core index']
  #allocation1 [shape = 'u32[72,128]{1,0:T(1,128)}', space=vmem, size = 0x9000, scoped, tag = 'internal scratch']
  %s0 = inlined_call_operand.hbm [shape: f32[2,8,512], index: 0, kind: input, shape index: {}]
  %s1 = inlined_call_operand.vmem [shape: f32[48,8], index: 1, kind: input, shape index: {}]
  %s2 = inlined_call_operand.hbm [shape: f32[3,256,256], index: 2, kind: input, shape index: {}]
  %s3 = inlined_call_operand.vmem [shape: f32[16,256], index: 3, kind: input, shape index: {}]
  %s4 = inlined_call_operand.hbm [shape: f32[2,16,512], index: 4, kind: output, shape index: {}]
  %s5 = sld [smem:[#allocation0]]
  $region57: #{tpu_custom_call.1} parent=0
    _
  %s7 = ssub.s32 1, %s5
  %s8 = scalar_select 0, %s7, %s5
  $region1: #{tpu_custom_call.1} parent=0
    #allocation2 [shape = 'u8[16384]{0}', space=vmem, size = 0x4000, scoped, tag = 'input window, operand 0']
    #allocation3 [shape = 's32[2]{0}', space=sflag, size = 0x8, scoped, tag = 'scoped memory for tpu_custom_call.1']
    #allocation4 [shape = 's32[2]{0}', space=sflag, size = 0x8, scoped, tag = 'scoped memory for tpu_custom_call.1']
    #allocation5 [shape = 'u8[786432]{0}', space=vmem, size = 0xc0000, scoped, tag = 'input window, operand 2, single buffered']
    #allocation6 [shape = 's32[1]{0}', space=sflag, size = 0x4, scoped, tag = 'scoped memory for tpu_custom_call.1']
    #allocation7 [shape = 'u8[32768]{0}', space=vmem, size = 0x8000, scoped, tag = 'output window, operand 0']
    %9 = vsyncpa [#allocation3], 0
    %s10 = scalar_lea.sflag [#allocation3], 1
    %11 = vsyncpa %s10, 0
    %12 = vsyncpa [#allocation6], 0
    %13 = vsyncpa [#allocation4], 0
    %s14 = scalar_lea.sflag [#allocation4], 1
    %15 = vsyncpa %s14, 0
    loop: start=0, step=1, limit=6
    $region2: #{tpu_custom_call.1} parent=1 // loop_pre_header
      _
    $region3: #{tpu_custom_call.1} parent=1 // loop_header
      %s17 = sphi 0, %s21
      %p18 = scmp.ge.s32.totalorder %s17, 6
      %s24 = sphi 0, %s36
      %s25 = sphi 0, %s32
      %s26 = sphi 0, %s24
      %s27 = sphi 0, %s25
      %s28 = sphi 0, %s26
      %s29 = sphi 0, %s27
      %s41 = sphi 0, %s43
      %s44 = sphi 0, %s41
      %s45 = sphi 0, %s44
      %s61 = sphi 0, %s45
      %s65 = sphi 0, %s65
      %s67 = sphi 0, %s65
      %s68 = sphi 0, %s67
      %s82 = sphi 0, %s68
      %s86 = sphi 0, %s86
      %s88 = sphi 0, %s86
      %s89 = sphi 0, %s88
      %s103 = sphi 0, %s89
      %s107 = sphi 0, %s107
      %s109 = sphi 0, %s107
      %s110 = sphi 0, %s109
      %s124 = sphi 0, %s110
      %s132 = sphi 0, %s134
      %s135 = sphi 0, %s132
      %s136 = sphi 0, %s135
      %s152 = sphi 0, %s136
    $region4: #{tpu_custom_call.1} parent=1 // loop_header_branch
      %20 = sbr.rel (%p18) target = $region8
    $region5: #{tpu_custom_call.1} parent=1 // loop_body
      %s22 = ssub.s32 %s17, 1
      %s23 = ssub.s32 %s17, 2
      %s30 = sadd.s32 1, %s25
      %p31 = scmp.ge.s32.totalorder %s30, 2
      %s32 = scalar_select %p31, 0, %s30
      %s33 = sadd.s32 1, %s24
      %s34 = scalar_select %p31, %s33, %s24
      %p35 = scmp.ge.s32.totalorder %s34, 2
      %s36 = scalar_select %p35, 0, %s34
      %s37 = ssub.s32 %s24, %s36
      %s38 = ssub.s32 %s25, %s32
      %s39 = sor.u32 %s37, %s38
      %p40 = scmp.eq.s32.totalorder %s39, 0
      %s42 = sadd.s32 %s41, 1
      %s43 = scalar_select %p40, %s41, %s42
      %p46 = pneg %p40
      %p47 = scmp.eq.s32.totalorder %s17, 3
      %p48 = por %p46, %p47
      %p49 = scmp.ne.s32.totalorder %s41, %s44
      %p50 = scmp.eq.s32.totalorder %s17, 0
      %p51 = por %p49, %p50
      %p52 = scmp.ne.s32.totalorder %s41, %s44
      %p53 = scmp.eq.s32.totalorder %s22, 3
      %p54 = por %p52, %p53
      %p55 = scmp.ne.s32.totalorder %s44, %s45
      %p56 = scmp.eq.s32.totalorder %s22, 0
      %p57 = por %p55, %p56
      %p58 = scmp.ne.s32.totalorder %s44, %s45
      %p59 = scmp.eq.s32.totalorder %s23, 3
      %p60 = por %p58, %p59
      %p62 = scmp.ne.s32.totalorder %s45, %s61
      %p63 = scmp.eq.s32.totalorder %s23, 0
      %p64 = por %p62, %p63
      %s66 = sadd.s32 %s65, 1
      %p69 = scmp.eq.s32.totalorder %s17, 3
      %p70 = scmp.ne.s32.totalorder %s65, %s67
      %p71 = scmp.eq.s32.totalorder %s17, 0
      %p72 = por %p70, %p71
      %p73 = scmp.ne.s32.totalorder %s65, %s67
      %p74 = scmp.eq.s32.totalorder %s22, 3
      %p75 = por %p73, %p74
      %p76 = scmp.ne.s32.totalorder %s67, %s68
      %p77 = scmp.eq.s32.totalorder %s22, 0
      %p78 = por %p76, %p77
      %p79 = scmp.ne.s32.totalorder %s67, %s68
      %p80 = scmp.eq.s32.totalorder %s23, 3
      %p81 = por %p79, %p80
      %p83 = scmp.ne.s32.totalorder %s68, %s82
      %p84 = scmp.eq.s32.totalorder %s23, 0
      %p85 = por %p83, %p84
      %s87 = sadd.s32 %s86, 1
      %p90 = scmp.eq.s32.totalorder %s17, 3
      %p91 = scmp.ne.s32.totalorder %s86, %s88
      %p92 = scmp.eq.s32.totalorder %s17, 0
      %p93 = por %p91, %p92
      %p94 = scmp.ne.s32.totalorder %s86, %s88
      %p95 = scmp.eq.s32.totalorder %s22, 3
      %p96 = por %p94, %p95
      %p97 = scmp.ne.s32.totalorder %s88, %s89
      %p98 = scmp.eq.s32.totalorder %s22, 0
      %p99 = por %p97, %p98
      %p100 = scmp.ne.s32.totalorder %s88, %s89
      %p101 = scmp.eq.s32.totalorder %s23, 3
      %p102 = por %p100, %p101
      %p104 = scmp.ne.s32.totalorder %s89, %s103
      %p105 = scmp.eq.s32.totalorder %s23, 0
      %p106 = por %p104, %p105
      %s108 = sadd.s32 %s107, 1
      %p111 = scmp.eq.s32.totalorder %s17, 3
      %p112 = scmp.ne.s32.totalorder %s107, %s109
      %p113 = scmp.eq.s32.totalorder %s17, 0
      %p114 = por %p112, %p113
      %p115 = scmp.ne.s32.totalorder %s107, %s109
      %p116 = scmp.eq.s32.totalorder %s22, 3
      %p117 = por %p115, %p116
      %p118 = scmp.ne.s32.totalorder %s109, %s110
      %p119 = scmp.eq.s32.totalorder %s22, 0
      %p120 = por %p118, %p119
      %p121 = scmp.ne.s32.totalorder %s109, %s110
      %p122 = scmp.eq.s32.totalorder %s23, 3
      %p123 = por %p121, %p122
      %p125 = scmp.ne.s32.totalorder %s110, %s124
      %p126 = scmp.eq.s32.totalorder %s23, 0
      %p127 = por %p125, %p126
      %s128 = ssub.s32 %s24, %s36
      %s129 = ssub.s32 %s25, %s32
      %s130 = sor.u32 %s128, %s129
      %p131 = scmp.eq.s32.totalorder %s130, 0
      %s133 = sadd.s32 %s132, 1
      %s134 = scalar_select %p131, %s132, %s133
      %p137 = pneg %p131
      %p138 = scmp.eq.s32.totalorder %s17, 3
      %p139 = por %p137, %p138
      %p140 = scmp.ne.s32.totalorder %s132, %s135
      %p141 = scmp.eq.s32.totalorder %s17, 0
      %p142 = por %p140, %p141
      %p143 = scmp.ne.s32.totalorder %s132, %s135
      %p144 = scmp.eq.s32.totalorder %s22, 3
      %p145 = por %p143, %p144
      %p146 = scmp.ne.s32.totalorder %s135, %s136
      %p147 = scmp.eq.s32.totalorder %s22, 0
      %p148 = por %p146, %p147
      %p149 = scmp.ne.s32.totalorder %s135, %s136
      %p150 = scmp.eq.s32.totalorder %s23, 3
      %p151 = por %p149, %p150
      %p153 = scmp.ne.s32.totalorder %s136, %s152
      %p154 = scmp.eq.s32.totalorder %s23, 0
      %p155 = por %p153, %p154
      %p156 = scmp.le.s32.totalorder 1, %s17
      %p157 = scmp.lt.s32.totalorder %s17, 5
      %p158 = pnand %p156, %p157
      %p159 = pneg %p158
      // Predicated region
      $region9: #{tpu_custom_call.1} parent=5 // pred_check
        _
      $region10: #{tpu_custom_call.1} parent=5 // pred_check_branch
        %161 = sbr.rel (%p158) target = $region12
      $region11: #{tpu_custom_call.1} parent=5 // pred_region
        %s162 = ssub.s32 %s17, 1
        // Predicated region
        $region13: #{tpu_custom_call.1} parent=11 // pred_check
          %p163 = pneg %p78
        $region14: #{tpu_custom_call.1} parent=11 // pred_check_branch
          %165 = sbr.rel (%p163) target = $region16
        $region15: #{tpu_custom_call.1} parent=11 // pred_region
          _
        $region16: #{tpu_custom_call.1} parent=11 // pred_fallthru
          _
        // Predicated region
        $region17: #{tpu_custom_call.1} parent=11 // pred_check
          %p166 = pneg %p99
        $region18: #{tpu_custom_call.1} parent=11 // pred_check_branch
          %168 = sbr.rel (%p166) target = $region20
        $region19: #{tpu_custom_call.1} parent=11 // pred_region
          %170 = vsyncadd [#allocation6], 0
          %s171 = sshll.u32 %s2, 4
          %s172 = int_to_ptr.hbm [resolvable:$true] %s171
          %s173 = sshll.u32 [#allocation5], 4
          %s174 = int_to_ptr.vmem [resolvable:$true] %s173
          %179 = dma.hbm_to_vmem [thread:$0]  %s172, 24576, %s174, [#allocation6], 256, 256, 16
        $region20: #{tpu_custom_call.1} parent=11 // pred_fallthru
          _
        // Predicated region
        $region21: #{tpu_custom_call.1} parent=11 // pred_check
          %p180 = pneg %p120
        $region22: #{tpu_custom_call.1} parent=11 // pred_check_branch
          %182 = sbr.rel (%p180) target = $region24
        $region23: #{tpu_custom_call.1} parent=11 // pred_region
          _
        $region24: #{tpu_custom_call.1} parent=11 // pred_fallthru
          _
      $region12: #{tpu_custom_call.1} parent=5 // pred_fallthru
        _
      %p183 = scmp.lt.s32.totalorder %s17, 4
      // Predicated region
      $region25: #{tpu_custom_call.1} parent=5 // pred_check
        %p184 = pneg %p183
      $region26: #{tpu_custom_call.1} parent=5 // pred_check_branch
        %186 = sbr.rel (%p184) target = $region28
      $region27: #{tpu_custom_call.1} parent=5 // pred_region
        // Predicated region
        $region29: #{tpu_custom_call.1} parent=27 // pred_check
          %p187 = pneg %p51
        $region30: #{tpu_custom_call.1} parent=27 // pred_check_branch
          %189 = sbr.rel (%p187) target = $region32
        $region31: #{tpu_custom_call.1} parent=27 // pred_region
          %s190 = sand.u32 %s41, 1
          %s191 = scalar_lea.sflag [#allocation3], %s190
          %s192 = sand.u32 %s41, 1
          %s193 = smul.addr %s192, 16
          %s194 = scalar_lea.vmem [#allocation2], %s193
          %s195 = smul.u32 2, %s25
          %197 = vsyncadd %s191, 0
          %s198 = smul.addr %s24, 4
          %s199 = sadd.s32 %s195, %s198
          %s200 = smul.addr %s199, 8
          %s201 = scalar_lea.hbm %s0, %s200
          %s203 = sshll.u32 %s201, 4
          %s204 = int_to_ptr.hbm [resolvable:$true] %s203
          %s205 = sshll.u32 %s194, 4
          %s206 = int_to_ptr.vmem [resolvable:$true] %s205
          %208 = dma.hbm_to_vmem [thread:$0]  %s204, 256, %s206, %s191
        $region32: #{tpu_custom_call.1} parent=27 // pred_fallthru
          _
      $region28: #{tpu_custom_call.1} parent=5 // pred_fallthru
        _
      %p209 = scmp.le.s32.totalorder 1, %s17
      %p210 = scmp.lt.s32.totalorder %s17, 5
      %p211 = pnand %p209, %p210
      %p212 = pneg %p211
      // Predicated region
      $region33: #{tpu_custom_call.1} parent=5 // pred_check
        _
      $region34: #{tpu_custom_call.1} parent=5 // pred_check_branch
        %214 = sbr.rel (%p211) target = $region36
      $region35: #{tpu_custom_call.1} parent=5 // pred_region
        %s215 = ssub.s32 %s17, 1
        %s216 = sand.u32 %s44, 1
        %s217 = scalar_lea.sflag [#allocation3], %s216
        %s218 = sand.u32 %s44, 1
        %s219 = smul.addr %s218, 16
        %s220 = scalar_lea.vmem [#allocation2], %s219
        // Predicated region
        $region37: #{tpu_custom_call.1} parent=35 // pred_check
          %p221 = pneg %p57
        $region38: #{tpu_custom_call.1} parent=35 // pred_check_branch
          %223 = sbr.rel (%p221) target = $region40
        $region39: #{tpu_custom_call.1} parent=35 // pred_region
          %225 = dma.done %s217, 256
        $region40: #{tpu_custom_call.1} parent=35 // pred_fallthru
          _
        // Predicated region
        $region41: #{tpu_custom_call.1} parent=35 // pred_check
          %p226 = pneg %p99
        $region42: #{tpu_custom_call.1} parent=35 // pred_check_branch
          %228 = sbr.rel (%p226) target = $region44
        $region43: #{tpu_custom_call.1} parent=35 // pred_region
          %230 = dma.done [#allocation6], 24576
        $region44: #{tpu_custom_call.1} parent=35 // pred_fallthru
          _
        %s231 = sand.u32 %s44, 1
        %s232 = scalar_lea.sflag [#allocation3], %s231
        %s233 = sand.u32 %s44, 1
        %s234 = smul.addr %s233, 16
        %s235 = scalar_lea.vmem [#allocation2], %s234
        %p236 = pneg %p57
        %p237 = pneg %p54
        %p238 = pneg %p78
        %p239 = pneg %p75
        %p240 = pneg %p99
        %p241 = pneg %p96
        %p242 = pneg %p120
        %p243 = pneg %p117
        %p244 = pneg %p148
        %p245 = pneg %p145
        %s246 = sand.u32 %s135, 1
        %s247 = scalar_lea.sflag [#allocation4], %s246
        %s248 = sand.u32 %s135, 1
        %s249 = smul.addr %s248, 32
        %s250 = scalar_lea.vmem [#allocation7], %s249
        %s251 = smul.u32 2, %s27
        %s252 = smul.u32 2, %s27
        %v253 = vld [vmem:[%s220] sm:$0xff]
        %v254 = vld [vmem:[%s220 + $0x8] sm:$0xff]
        %v255 = vld [vmem:[%s1] sm:$0xff]
        %v256 = vld [vmem:[%s1 + $0x8] sm:$0xff]
        %v257 = vld [vmem:[%s1 + $0x10] sm:$0xff]
        %v258 = vld [vmem:[%s1 + $0x18] sm:$0xff]
        %v259 = vld [vmem:[%s1 + $0x20] sm:$0xff]
        %v260 = vld [vmem:[%s1 + $0x28] sm:$0xff]
        %vm261 = vcmask 64512
        %v263 = vsel %vm261, %v255, 0
        %v266 = vsel %vm261, %v256, 0
        %v269 = vsel %vm261, %v257, 0
        %v272 = vsel %vm261, %v258, 0
        %v275 = vsel %vm261, %v259, 0
        %v278 = vsel %vm261, %v260, 0
        %280 = vmatpush.msra.mxu0 0.0
        %281 = vmatpush.msra.mxu0 0.0
        %282 = vmatpush.msra.mxu0 0.0
        %283 = vmatpush.msra.mxu0 0.0
        %284 = vmatpush.msra.mxu0 0.0
        %285 = vmatpush.msra.mxu0 0.0
        %286 = vmatpush.msra.mxu0 0.0
        %287 = vmatpush.msra.mxu0 0.0
        %288 = vmatpush.msra.mxu0 0.0
        %289 = vmatpush.msra.mxu0 0.0
        %290 = vmatpush.msra.mxu0 0.0
        %291 = vmatpush.msra.mxu0 0.0
        %292 = vmatpush.msra.mxu0 0.0
        %293 = vmatpush.msra.mxu0 0.0
        %294 = vmatpush.msra.mxu0 0.0
        %295 = vmatpush.msra.mxu0 %v253
        %296 = vmatmul.f32.gmra.mxu0 %v263
        %v297 = vpop.f32.mrf.mxu0
        %v298 = vadd.f32 0.0, %v297
        %299 = vmatmul.f32.gmra.mxu0 %v266
        %v300 = vpop.f32.mrf.mxu0
        %v301 = vadd.f32 0.0, %v300
        %302 = vmatmul.f32.gmra.mxu0 %v269
        %v303 = vpop.f32.mrf.mxu0
        %v304 = vadd.f32 0.0, %v303
        %305 = vmatmul.f32.gmra.mxu0 %v272
        %v306 = vpop.f32.mrf.mxu0
        %v307 = vadd.f32 0.0, %v306
        %308 = vmatmul.f32.gmra.mxu0 %v275
        %v309 = vpop.f32.mrf.mxu0
        %v310 = vadd.f32 0.0, %v309
        %311 = vmatmul.f32.gmra.mxu0 %v278
        %v312 = vpop.f32.mrf.mxu0
        %v313 = vadd.f32 0.0, %v312
        %314 = vdwg.mxu0
        %315 = vmatpush.msra.mxu0 0.0
        %316 = vmatpush.msra.mxu0 0.0
        %317 = vmatpush.msra.mxu0 0.0
        %318 = vmatpush.msra.mxu0 0.0
        %319 = vmatpush.msra.mxu0 0.0
        %320 = vmatpush.msra.mxu0 0.0
        %321 = vmatpush.msra.mxu0 0.0
        %322 = vmatpush.msra.mxu0 0.0
        %323 = vmatpush.msra.mxu0 0.0
        %324 = vmatpush.msra.mxu0 0.0
        %325 = vmatpush.msra.mxu0 0.0
        %326 = vmatpush.msra.mxu0 0.0
        %327 = vmatpush.msra.mxu0 0.0
        %328 = vmatpush.msra.mxu0 0.0
        %329 = vmatpush.msra.mxu0 0.0
        %330 = vmatpush.msra.mxu0 %v254
        %331 = vmatmul.f32.gmra.mxu0 %v263
        %v332 = vpop.f32.mrf.mxu0
        %v333 = vadd.f32 0.0, %v332
        %334 = vmatmul.f32.gmra.mxu0 %v266
        %v335 = vpop.f32.mrf.mxu0
        %v336 = vadd.f32 0.0, %v335
        %337 = vmatmul.f32.gmra.mxu0 %v269
        %v338 = vpop.f32.mrf.mxu0
        %v339 = vadd.f32 0.0, %v338
        %340 = vmatmul.f32.gmra.mxu0 %v272
        %v341 = vpop.f32.mrf.mxu0
        %v342 = vadd.f32 0.0, %v341
        %343 = vmatmul.f32.gmra.mxu0 %v275
        %v344 = vpop.f32.mrf.mxu0
        %v345 = vadd.f32 0.0, %v344
        %346 = vmatmul.f32.gmra.mxu0 %v278
        %v347 = vpop.f32.mrf.mxu0
        %v348 = vadd.f32 0.0, %v347
        %349 = vdwg.mxu0
        %v350 = vld [vmem:[%s3] sm:$0xff]
        %v351 = vld [vmem:[%s3 + $0x8] sm:$0xff]
        %v352 = vld [vmem:[%s3 + $0x10] sm:$0xff]
        %v353 = vld [vmem:[%s3 + $0x18] sm:$0xff]
        %v354 = vld [vmem:[#allocation5] sm:$0xff]
        %v355 = vld [vmem:[#allocation5 + $0x8] sm:$0xff]
        %v356 = vld [vmem:[#allocation5 + $0x10] sm:$0xff]
        %v357 = vld [vmem:[#allocation5 + $0x18] sm:$0xff]
        %v358 = vld [vmem:[#allocation5 + $0x20] sm:$0xff]
        %v359 = vld [vmem:[#allocation5 + $0x28] sm:$0xff]
        %v360 = vld [vmem:[#allocation5 + $0x30] sm:$0xff]
        %v361 = vld [vmem:[#allocation5 + $0x38] sm:$0xff]
        %v362 = vld [vmem:[#allocation5 + $0x40] sm:$0xff]
        %v363 = vld [vmem:[#allocation5 + $0x48] sm:$0xff]
        %v364 = vld [vmem:[#allocation5 + $0x50] sm:$0xff]
        %v365 = vld [vmem:[#allocation5 + $0x58] sm:$0xff]
        %v366 = vld [vmem:[#allocation5 + $0x60] sm:$0xff]
        %v367 = vld [vmem:[#allocation5 + $0x68] sm:$0xff]
        %v368 = vld [vmem:[#allocation5 + $0x70] sm:$0xff]
        %v369 = vld [vmem:[#allocation5 + $0x78] sm:$0xff]
        %v370 = vld [vmem:[#allocation5 + $0x80] sm:$0xff]
        %v371 = vld [vmem:[#allocation5 + $0x88] sm:$0xff]
        %v372 = vld [vmem:[#allocation5 + $0x90] sm:$0xff]
        %v373 = vld [vmem:[#allocation5 + $0x98] sm:$0xff]
        %v374 = vld [vmem:[#allocation5 + $0xa0] sm:$0xff]
        %v375 = vld [vmem:[#allocation5 + $0xa8] sm:$0xff]
        %v376 = vld [vmem:[#allocation5 + $0xb0] sm:$0xff]
        %v377 = vld [vmem:[#allocation5 + $0xb8] sm:$0xff]
        %v378 = vld [vmem:[#allocation5 + $0xc0] sm:$0xff]
        %v379 = vld [vmem:[#allocation5 + $0xc8] sm:$0xff]
        %v380 = vld [vmem:[#allocation5 + $0xd0] sm:$0xff]
        %v381 = vld [vmem:[#allocation5 + $0xd8] sm:$0xff]
        %v382 = vld [vmem:[#allocation5 + $0xe0] sm:$0xff]
        %v383 = vld [vmem:[#allocation5 + $0xe8] sm:$0xff]
        %v384 = vld [vmem:[#allocation5 + $0xf0] sm:$0xff]
        %v385 = vld [vmem:[#allocation5 + $0xf8] sm:$0xff]
        %v386 = vld [vmem:[#allocation5 + $0x100] sm:$0xff]
        %v387 = vld [vmem:[#allocation5 + $0x108] sm:$0xff]
        %v388 = vld [vmem:[#allocation5 + $0x110] sm:$0xff]
        %v389 = vld [vmem:[#allocation5 + $0x118] sm:$0xff]
        %v390 = vld [vmem:[#allocation5 + $0x120] sm:$0xff]
        %v391 = vld [vmem:[#allocation5 + $0x128] sm:$0xff]
        %v392 = vld [vmem:[#allocation5 + $0x130] sm:$0xff]
        %v393 = vld [vmem:[#allocation5 + $0x138] sm:$0xff]
        %v394 = vld [vmem:[#allocation5 + $0x140] sm:$0xff]
        %v395 = vld [vmem:[#allocation5 + $0x148] sm:$0xff]
        %v396 = vld [vmem:[#allocation5 + $0x150] sm:$0xff]
        %v397 = vld [vmem:[#allocation5 + $0x158] sm:$0xff]
        %v398 = vld [vmem:[#allocation5 + $0x160] sm:$0xff]
        %v399 = vld [vmem:[#allocation5 + $0x168] sm:$0xff]
        %v400 = vld [vmem:[#allocation5 + $0x170] sm:$0xff]
        %v401 = vld [vmem:[#allocation5 + $0x178] sm:$0xff]
        %v402 = vld [vmem:[#allocation5 + $0x180] sm:$0xff]
        %v403 = vld [vmem:[#allocation5 + $0x188] sm:$0xff]
        %v404 = vld [vmem:[#allocation5 + $0x190] sm:$0xff]
        %v405 = vld [vmem:[#allocation5 + $0x198] sm:$0xff]
        %v406 = vld [vmem:[#allocation5 + $0x1a0] sm:$0xff]
        %v407 = vld [vmem:[#allocation5 + $0x1a8] sm:$0xff]
        %v408 = vld [vmem:[#allocation5 + $0x1b0] sm:$0xff]
        %v409 = vld [vmem:[#allocation5 + $0x1b8] sm:$0xff]
        %v410 = vld [vmem:[#allocation5 + $0x1c0] sm:$0xff]
        %v411 = vld [vmem:[#allocation5 + $0x1c8] sm:$0xff]
        %v412 = vld [vmem:[#allocation5 + $0x1d0] sm:$0xff]
        %v413 = vld [vmem:[#allocation5 + $0x1d8] sm:$0xff]
        %v414 = vld [vmem:[#allocation5 + $0x1e0] sm:$0xff]
        %v415 = vld [vmem:[#allocation5 + $0x1e8] sm:$0xff]
        %v416 = vld [vmem:[#allocation5 + $0x1f0] sm:$0xff]
        %v417 = vld [vmem:[#allocation5 + $0x1f8] sm:$0xff]
        %418 = vmatpush.msra.mxu0 %v384
        %419 = vmatpush.msra.mxu0 %v382
        %420 = vmatpush.msra.mxu0 %v380
        %421 = vmatpush.msra.mxu0 %v378
        %422 = vmatpush.msra.mxu0 %v376
        %423 = vmatpush.msra.mxu0 %v374
        %424 = vmatpush.msra.mxu0 %v372
        %425 = vmatpush.msra.mxu0 %v370
        %426 = vmatpush.msra.mxu0 %v368
        %427 = vmatpush.msra.mxu0 %v366
        %428 = vmatpush.msra.mxu0 %v364
        %429 = vmatpush.msra.mxu0 %v362
        %430 = vmatpush.msra.mxu0 %v360
        %431 = vmatpush.msra.mxu0 %v358
        %432 = vmatpush.msra.mxu0 %v356
        %433 = vmatpush.msra.mxu0 %v354
        %434 = vmatmul.f32.gmra.mxu0 %v298
        %v435 = vpop.f32.mrf.mxu0
        %v436 = vadd.f32 0.0, %v435
        %437 = vmatmul.f32.gmra.mxu0 %v301
        %v438 = vpop.f32.mrf.mxu0
        %v439 = vadd.f32 0.0, %v438
        %440 = vdwg.mxu0
        %441 = vmatpush.msra.mxu0 %v416
        %442 = vmatpush.msra.mxu0 %v414
        %443 = vmatpush.msra.mxu0 %v412
        %444 = vmatpush.msra.mxu0 %v410
        %445 = vmatpush.msra.mxu0 %v408
        %446 = vmatpush.msra.mxu0 %v406
        %447 = vmatpush.msra.mxu0 %v404
        %448 = vmatpush.msra.mxu0 %v402
        %449 = vmatpush.msra.mxu0 %v400
        %450 = vmatpush.msra.mxu0 %v398
        %451 = vmatpush.msra.mxu0 %v396
        %452 = vmatpush.msra.mxu0 %v394
        %453 = vmatpush.msra.mxu0 %v392
        %454 = vmatpush.msra.mxu0 %v390
        %455 = vmatpush.msra.mxu0 %v388
        %456 = vmatpush.msra.mxu0 %v386
        %457 = vmatmul.f32.gmra.mxu0 %v333
        %v458 = vpop.f32.mrf.mxu0
        %v459 = vadd.f32 %v436, %v458
        %460 = vmatmul.f32.gmra.mxu0 %v336
        %v461 = vpop.f32.mrf.mxu0
        %v462 = vadd.f32 %v439, %v461
        %463 = vdwg.mxu0
        %464 = vmatpush.msra.mxu0 %v385
        %465 = vmatpush.msra.mxu0 %v383
        %466 = vmatpush.msra.mxu0 %v381
        %467 = vmatpush.msra.mxu0 %v379
        %468 = vmatpush.msra.mxu0 %v377
        %469 = vmatpush.msra.mxu0 %v375
        %470 = vmatpush.msra.mxu0 %v373
        %471 = vmatpush.msra.mxu0 %v371
        %472 = vmatpush.msra.mxu0 %v369
        %473 = vmatpush.msra.mxu0 %v367
        %474 = vmatpush.msra.mxu0 %v365
        %475 = vmatpush.msra.mxu0 %v363
        %476 = vmatpush.msra.mxu0 %v361
        %477 = vmatpush.msra.mxu0 %v359
        %478 = vmatpush.msra.mxu0 %v357
        %479 = vmatpush.msra.mxu0 %v355
        %480 = vmatmul.f32.gmra.mxu0 %v298
        %v481 = vpop.f32.mrf.mxu0
        %v482 = vadd.f32 0.0, %v481
        %483 = vmatmul.f32.gmra.mxu0 %v301
        %v484 = vpop.f32.mrf.mxu0
        %v485 = vadd.f32 0.0, %v484
        %486 = vdwg.mxu0
        %487 = vmatpush.msra.mxu0 %v417
        %488 = vmatpush.msra.mxu0 %v415
        %489 = vmatpush.msra.mxu0 %v413
        %490 = vmatpush.msra.mxu0 %v411
        %491 = vmatpush.msra.mxu0 %v409
        %492 = vmatpush.msra.mxu0 %v407
        %493 = vmatpush.msra.mxu0 %v405
        %494 = vmatpush.msra.mxu0 %v403
        %495 = vmatpush.msra.mxu0 %v401
        %496 = vmatpush.msra.mxu0 %v399
        %497 = vmatpush.msra.mxu0 %v397
        %498 = vmatpush.msra.mxu0 %v395
        %499 = vmatpush.msra.mxu0 %v393
        %500 = vmatpush.msra.mxu0 %v391
        %501 = vmatpush.msra.mxu0 %v389
        %502 = vmatpush.msra.mxu0 %v387
        %503 = vmatmul.f32.gmra.mxu0 %v333
        %v504 = vpop.f32.mrf.mxu0
        %v505 = vadd.f32 %v482, %v504
        %506 = vmatmul.f32.gmra.mxu0 %v336
        %v507 = vpop.f32.mrf.mxu0
        %v508 = vadd.f32 %v485, %v507
        %509 = vdwg.mxu0
        %v510 = vadd.f32 %v350, %v459
        %v511 = vadd.f32 %v351, %v505
        %v512 = vadd.f32 %v352, %v462
        %v513 = vadd.f32 %v353, %v508
        %s514 = scalar_lea.vmem [#allocation5], 512
        %v515 = vld [vmem:[%s514] sm:$0xff]
        %v516 = vld [vmem:[%s514 + $0x8] sm:$0xff]
        %v517 = vld [vmem:[%s514 + $0x10] sm:$0xff]
        %v518 = vld [vmem:[%s514 + $0x18] sm:$0xff]
        %v519 = vld [vmem:[%s514 + $0x20] sm:$0xff]
        %v520 = vld [vmem:[%s514 + $0x28] sm:$0xff]
        %v521 = vld [vmem:[%s514 + $0x30] sm:$0xff]
        %v522 = vld [vmem:[%s514 + $0x38] sm:$0xff]
        %v523 = vld [vmem:[%s514 + $0x40] sm:$0xff]
        %v524 = vld [vmem:[%s514 + $0x48] sm:$0xff]
        %v525 = vld [vmem:[%s514 + $0x50] sm:$0xff]
        %v526 = vld [vmem:[%s514 + $0x58] sm:$0xff]
        %v527 = vld [vmem:[%s514 + $0x60] sm:$0xff]
        %v528 = vld [vmem:[%s514 + $0x68] sm:$0xff]
        %v529 = vld [vmem:[%s514 + $0x70] sm:$0xff]
        %v530 = vld [vmem:[%s514 + $0x78] sm:$0xff]
        %v531 = vld [vmem:[%s514 + $0x80] sm:$0xff]
        %v532 = vld [vmem:[%s514 + $0x88] sm:$0xff]
        %v533 = vld [vmem:[%s514 + $0x90] sm:$0xff]
        %v534 = vld [vmem:[%s514 + $0x98] sm:$0xff]
        %v535 = vld [vmem:[%s514 + $0xa0] sm:$0xff]
        %v536 = vld [vmem:[%s514 + $0xa8] sm:$0xff]
        %v537 = vld [vmem:[%s514 + $0xb0] sm:$0xff]
        %v538 = vld [vmem:[%s514 + $0xb8] sm:$0xff]
        %v539 = vld [vmem:[%s514 + $0xc0] sm:$0xff]
        %v540 = vld [vmem:[%s514 + $0xc8] sm:$0xff]
        %v541 = vld [vmem:[%s514 + $0xd0] sm:$0xff]
        %v542 = vld [vmem:[%s514 + $0xd8] sm:$0xff]
        %v543 = vld [vmem:[%s514 + $0xe0] sm:$0xff]
        %v544 = vld [vmem:[%s514 + $0xe8] sm:$0xff]
        %v545 = vld [vmem:[%s514 + $0xf0] sm:$0xff]
        %v546 = vld [vmem:[%s514 + $0xf8] sm:$0xff]
        %v547 = vld [vmem:[%s514 + $0x100] sm:$0xff]
        %v548 = vld [vmem:[%s514 + $0x108] sm:$0xff]
        %v549 = vld [vmem:[%s514 + $0x110] sm:$0xff]
        %v550 = vld [vmem:[%s514 + $0x118] sm:$0xff]
        %v551 = vld [vmem:[%s514 + $0x120] sm:$0xff]
        %v552 = vld [vmem:[%s514 + $0x128] sm:$0xff]
        %v553 = vld [vmem:[%s514 + $0x130] sm:$0xff]
        %v554 = vld [vmem:[%s514 + $0x138] sm:$0xff]
        %v555 = vld [vmem:[%s514 + $0x140] sm:$0xff]
        %v556 = vld [vmem:[%s514 + $0x148] sm:$0xff]
        %v557 = vld [vmem:[%s514 + $0x150] sm:$0xff]
        %v558 = vld [vmem:[%s514 + $0x158] sm:$0xff]
        %v559 = vld [vmem:[%s514 + $0x160] sm:$0xff]
        %v560 = vld [vmem:[%s514 + $0x168] sm:$0xff]
        %v561 = vld [vmem:[%s514 + $0x170] sm:$0xff]
        %v562 = vld [vmem:[%s514 + $0x178] sm:$0xff]
        %v563 = vld [vmem:[%s514 + $0x180] sm:$0xff]
        %v564 = vld [vmem:[%s514 + $0x188] sm:$0xff]
        %v565 = vld [vmem:[%s514 + $0x190] sm:$0xff]
        %v566 = vld [vmem:[%s514 + $0x198] sm:$0xff]
        %v567 = vld [vmem:[%s514 + $0x1a0] sm:$0xff]
        %v568 = vld [vmem:[%s514 + $0x1a8] sm:$0xff]
        %v569 = vld [vmem:[%s514 + $0x1b0] sm:$0xff]
        %v570 = vld [vmem:[%s514 + $0x1b8] sm:$0xff]
        %v571 = vld [vmem:[%s514 + $0x1c0] sm:$0xff]
        %v572 = vld [vmem:[%s514 + $0x1c8] sm:$0xff]
        %v573 = vld [vmem:[%s514 + $0x1d0] sm:$0xff]
        %v574 = vld [vmem:[%s514 + $0x1d8] sm:$0xff]
        %v575 = vld [vmem:[%s514 + $0x1e0] sm:$0xff]
        %v576 = vld [vmem:[%s514 + $0x1e8] sm:$0xff]
        %v577 = vld [vmem:[%s514 + $0x1f0] sm:$0xff]
        %v578 = vld [vmem:[%s514 + $0x1f8] sm:$0xff]
        %579 = vmatpush.msra.mxu0 %v545
        %580 = vmatpush.msra.mxu0 %v543
        %581 = vmatpush.msra.mxu0 %v541
        %582 = vmatpush.msra.mxu0 %v539
        %583 = vmatpush.msra.mxu0 %v537
        %584 = vmatpush.msra.mxu0 %v535
        %585 = vmatpush.msra.mxu0 %v533
        %586 = vmatpush.msra.mxu0 %v531
        %587 = vmatpush.msra.mxu0 %v529
        %588 = vmatpush.msra.mxu0 %v527
        %589 = vmatpush.msra.mxu0 %v525
        %590 = vmatpush.msra.mxu0 %v523
        %591 = vmatpush.msra.mxu0 %v521
        %592 = vmatpush.msra.mxu0 %v519
        %593 = vmatpush.msra.mxu0 %v517
        %594 = vmatpush.msra.mxu0 %v515
        %595 = vmatmul.f32.gmra.mxu0 %v304
        %v596 = vpop.f32.mrf.mxu0
        %v597 = vadd.f32 0.0, %v596
        %598 = vmatmul.f32.gmra.mxu0 %v307
        %v599 = vpop.f32.mrf.mxu0
        %v600 = vadd.f32 0.0, %v599
        %601 = vdwg.mxu0
        %602 = vmatpush.msra.mxu0 %v577
        %603 = vmatpush.msra.mxu0 %v575
        %604 = vmatpush.msra.mxu0 %v573
        %605 = vmatpush.msra.mxu0 %v571
        %606 = vmatpush.msra.mxu0 %v569
        %607 = vmatpush.msra.mxu0 %v567
        %608 = vmatpush.msra.mxu0 %v565
        %609 = vmatpush.msra.mxu0 %v563
        %610 = vmatpush.msra.mxu0 %v561
        %611 = vmatpush.msra.mxu0 %v559
        %612 = vmatpush.msra.mxu0 %v557
        %613 = vmatpush.msra.mxu0 %v555
        %614 = vmatpush.msra.mxu0 %v553
        %615 = vmatpush.msra.mxu0 %v551
        %616 = vmatpush.msra.mxu0 %v549
        %617 = vmatpush.msra.mxu0 %v547
        %618 = vmatmul.f32.gmra.mxu0 %v339
        %v619 = vpop.f32.mrf.mxu0
        %v620 = vadd.f32 %v597, %v619
        %621 = vmatmul.f32.gmra.mxu0 %v342
        %v622 = vpop.f32.mrf.mxu0
        %v623 = vadd.f32 %v600, %v622
        %624 = vdwg.mxu0
        %625 = vmatpush.msra.mxu0 %v546
        %626 = vmatpush.msra.mxu0 %v544
        %627 = vmatpush.msra.mxu0 %v542
        %628 = vmatpush.msra.mxu0 %v540
        %629 = vmatpush.msra.mxu0 %v538
        %630 = vmatpush.msra.mxu0 %v536
        %631 = vmatpush.msra.mxu0 %v534
        %632 = vmatpush.msra.mxu0 %v532
        %633 = vmatpush.msra.mxu0 %v530
        %634 = vmatpush.msra.mxu0 %v528
        %635 = vmatpush.msra.mxu0 %v526
        %636 = vmatpush.msra.mxu0 %v524
        %637 = vmatpush.msra.mxu0 %v522
        %638 = vmatpush.msra.mxu0 %v520
        %639 = vmatpush.msra.mxu0 %v518
        %640 = vmatpush.msra.mxu0 %v516
        %641 = vmatmul.f32.gmra.mxu0 %v304
        %v642 = vpop.f32.mrf.mxu0
        %v643 = vadd.f32 0.0, %v642
        %644 = vmatmul.f32.gmra.mxu0 %v307
        %v645 = vpop.f32.mrf.mxu0
        %v646 = vadd.f32 0.0, %v645
        %647 = vdwg.mxu0
        %648 = vmatpush.msra.mxu0 %v578
        %649 = vmatpush.msra.mxu0 %v576
        %650 = vmatpush.msra.mxu0 %v574
        %651 = vmatpush.msra.mxu0 %v572
        %652 = vmatpush.msra.mxu0 %v570
        %653 = vmatpush.msra.mxu0 %v568
        %654 = vmatpush.msra.mxu0 %v566
        %655 = vmatpush.msra.mxu0 %v564
        %656 = vmatpush.msra.mxu0 %v562
        %657 = vmatpush.msra.mxu0 %v560
        %658 = vmatpush.msra.mxu0 %v558
        %659 = vmatpush.msra.mxu0 %v556
        %660 = vmatpush.msra.mxu0 %v554
        %661 = vmatpush.msra.mxu0 %v552
        %662 = vmatpush.msra.mxu0 %v550
        %663 = vmatpush.msra.mxu0 %v548
        %664 = vmatmul.f32.gmra.mxu0 %v339
        %v665 = vpop.f32.mrf.mxu0
        %v666 = vadd.f32 %v643, %v665
        %667 = vmatmul.f32.gmra.mxu0 %v342
        %v668 = vpop.f32.mrf.mxu0
        %v669 = vadd.f32 %v646, %v668
        %670 = vdwg.mxu0
        %v671 = vadd.f32 %v510, %v620
        %v672 = vadd.f32 %v511, %v666
        %v673 = vadd.f32 %v512, %v623
        %v674 = vadd.f32 %v513, %v669
        %s675 = scalar_lea.vmem [#allocation5], 1024
        %v676 = vld [vmem:[%s675] sm:$0xff]
        %v677 = vld [vmem:[%s675 + $0x8] sm:$0xff]
        %v678 = vld [vmem:[%s675 + $0x10] sm:$0xff]
        %v679 = vld [vmem:[%s675 + $0x18] sm:$0xff]
        %v680 = vld [vmem:[%s675 + $0x20] sm:$0xff]
        %v681 = vld [vmem:[%s675 + $0x28] sm:$0xff]
        %v682 = vld [vmem:[%s675 + $0x30] sm:$0xff]
        %v683 = vld [vmem:[%s675 + $0x38] sm:$0xff]
        %v684 = vld [vmem:[%s675 + $0x40] sm:$0xff]
        %v685 = vld [vmem:[%s675 + $0x48] sm:$0xff]
        %v686 = vld [vmem:[%s675 + $0x50] sm:$0xff]
        %v687 = vld [vmem:[%s675 + $0x58] sm:$0xff]
        %v688 = vld [vmem:[%s675 + $0x60] sm:$0xff]
        %v689 = vld [vmem:[%s675 + $0x68] sm:$0xff]
        %v690 = vld [vmem:[%s675 + $0x70] sm:$0xff]
        %v691 = vld [vmem:[%s675 + $0x78] sm:$0xff]
        %v692 = vld [vmem:[%s675 + $0x80] sm:$0xff]
        %v693 = vld [vmem:[%s675 + $0x88] sm:$0xff]
        %v694 = vld [vmem:[%s675 + $0x90] sm:$0xff]
        %v695 = vld [vmem:[%s675 + $0x98] sm:$0xff]
        %v696 = vld [vmem:[%s675 + $0xa0] sm:$0xff]
        %v697 = vld [vmem:[%s675 + $0xa8] sm:$0xff]
        %v698 = vld [vmem:[%s675 + $0xb0] sm:$0xff]
        %v699 = vld [vmem:[%s675 + $0xb8] sm:$0xff]
        %v700 = vld [vmem:[%s675 + $0xc0] sm:$0xff]
        %v701 = vld [vmem:[%s675 + $0xc8] sm:$0xff]
        %v702 = vld [vmem:[%s675 + $0xd0] sm:$0xff]
        %v703 = vld [vmem:[%s675 + $0xd8] sm:$0xff]
        %v704 = vld [vmem:[%s675 + $0xe0] sm:$0xff]
        %v705 = vld [vmem:[%s675 + $0xe8] sm:$0xff]
        %v706 = vld [vmem:[%s675 + $0xf0] sm:$0xff]
        %v707 = vld [vmem:[%s675 + $0xf8] sm:$0xff]
        %v708 = vld [vmem:[%s675 + $0x100] sm:$0xff]
        %v709 = vld [vmem:[%s675 + $0x108] sm:$0xff]
        %v710 = vld [vmem:[%s675 + $0x110] sm:$0xff]
        %v711 = vld [vmem:[%s675 + $0x118] sm:$0xff]
        %v712 = vld [vmem:[%s675 + $0x120] sm:$0xff]
        %v713 = vld [vmem:[%s675 + $0x128] sm:$0xff]
        %v714 = vld [vmem:[%s675 + $0x130] sm:$0xff]
        %v715 = vld [vmem:[%s675 + $0x138] sm:$0xff]
        %v716 = vld [vmem:[%s675 + $0x140] sm:$0xff]
        %v717 = vld [vmem:[%s675 + $0x148] sm:$0xff]
        %v718 = vld [vmem:[%s675 + $0x150] sm:$0xff]
        %v719 = vld [vmem:[%s675 + $0x158] sm:$0xff]
        %v720 = vld [vmem:[%s675 + $0x160] sm:$0xff]
        %v721 = vld [vmem:[%s675 + $0x168] sm:$0xff]
        %v722 = vld [vmem:[%s675 + $0x170] sm:$0xff]
        %v723 = vld [vmem:[%s675 + $0x178] sm:$0xff]
        %v724 = vld [vmem:[%s675 + $0x180] sm:$0xff]
        %v725 = vld [vmem:[%s675 + $0x188] sm:$0xff]
        %v726 = vld [vmem:[%s675 + $0x190] sm:$0xff]
        %v727 = vld [vmem:[%s675 + $0x198] sm:$0xff]
        %v728 = vld [vmem:[%s675 + $0x1a0] sm:$0xff]
        %v729 = vld [vmem:[%s675 + $0x1a8] sm:$0xff]
        %v730 = vld [vmem:[%s675 + $0x1b0] sm:$0xff]
        %v731 = vld [vmem:[%s675 + $0x1b8] sm:$0xff]
        %v732 = vld [vmem:[%s675 + $0x1c0] sm:$0xff]
        %v733 = vld [vmem:[%s675 + $0x1c8] sm:$0xff]
        %v734 = vld [vmem:[%s675 + $0x1d0] sm:$0xff]
        %v735 = vld [vmem:[%s675 + $0x1d8] sm:$0xff]
        %v736 = vld [vmem:[%s675 + $0x1e0] sm:$0xff]
        %v737 = vld [vmem:[%s675 + $0x1e8] sm:$0xff]
        %v738 = vld [vmem:[%s675 + $0x1f0] sm:$0xff]
        %v739 = vld [vmem:[%s675 + $0x1f8] sm:$0xff]
        %740 = vmatpush.msra.mxu0 %v706
        %741 = vmatpush.msra.mxu0 %v704
        %742 = vmatpush.msra.mxu0 %v702
        %743 = vmatpush.msra.mxu0 %v700
        %744 = vmatpush.msra.mxu0 %v698
        %745 = vmatpush.msra.mxu0 %v696
        %746 = vmatpush.msra.mxu0 %v694
        %747 = vmatpush.msra.mxu0 %v692
        %748 = vmatpush.msra.mxu0 %v690
        %749 = vmatpush.msra.mxu0 %v688
        %750 = vmatpush.msra.mxu0 %v686
        %751 = vmatpush.msra.mxu0 %v684
        %752 = vmatpush.msra.mxu0 %v682
        %753 = vmatpush.msra.mxu0 %v680
        %754 = vmatpush.msra.mxu0 %v678
        %755 = vmatpush.msra.mxu0 %v676
        %756 = vmatmul.f32.gmra.mxu0 %v310
        %v757 = vpop.f32.mrf.mxu0
        %v758 = vadd.f32 0.0, %v757
        %759 = vmatmul.f32.gmra.mxu0 %v313
        %v760 = vpop.f32.mrf.mxu0
        %v761 = vadd.f32 0.0, %v760
        %762 = vdwg.mxu0
        %763 = vmatpush.msra.mxu0 %v738
        %764 = vmatpush.msra.mxu0 %v736
        %765 = vmatpush.msra.mxu0 %v734
        %766 = vmatpush.msra.mxu0 %v732
        %767 = vmatpush.msra.mxu0 %v730
        %768 = vmatpush.msra.mxu0 %v728
        %769 = vmatpush.msra.mxu0 %v726
        %770 = vmatpush.msra.mxu0 %v724
        %771 = vmatpush.msra.mxu0 %v722
        %772 = vmatpush.msra.mxu0 %v720
        %773 = vmatpush.msra.mxu0 %v718
        %774 = vmatpush.msra.mxu0 %v716
        %775 = vmatpush.msra.mxu0 %v714
        %776 = vmatpush.msra.mxu0 %v712
        %777 = vmatpush.msra.mxu0 %v710
        %778 = vmatpush.msra.mxu0 %v708
        %779 = vmatmul.f32.gmra.mxu0 %v345
        %v780 = vpop.f32.mrf.mxu0
        %v781 = vadd.f32 %v758, %v780
        %782 = vmatmul.f32.gmra.mxu0 %v348
        %v783 = vpop.f32.mrf.mxu0
        %v784 = vadd.f32 %v761, %v783
        %785 = vdwg.mxu0
        %786 = vmatpush.msra.mxu0 %v707
        %787 = vmatpush.msra.mxu0 %v705
        %788 = vmatpush.msra.mxu0 %v703
        %789 = vmatpush.msra.mxu0 %v701
        %790 = vmatpush.msra.mxu0 %v699
        %791 = vmatpush.msra.mxu0 %v697
        %792 = vmatpush.msra.mxu0 %v695
        %793 = vmatpush.msra.mxu0 %v693
        %794 = vmatpush.msra.mxu0 %v691
        %795 = vmatpush.msra.mxu0 %v689
        %796 = vmatpush.msra.mxu0 %v687
        %797 = vmatpush.msra.mxu0 %v685
        %798 = vmatpush.msra.mxu0 %v683
        %799 = vmatpush.msra.mxu0 %v681
        %800 = vmatpush.msra.mxu0 %v679
        %801 = vmatpush.msra.mxu0 %v677
        %802 = vmatmul.f32.gmra.mxu0 %v310
        %v803 = vpop.f32.mrf.mxu0
        %v804 = vadd.f32 0.0, %v803
        %805 = vmatmul.f32.gmra.mxu0 %v313
        %v806 = vpop.f32.mrf.mxu0
        %v807 = vadd.f32 0.0, %v806
        %808 = vdwg.mxu0
        %809 = vmatpush.msra.mxu0 %v739
        %810 = vmatpush.msra.mxu0 %v737
        %811 = vmatpush.msra.mxu0 %v735
        %812 = vmatpush.msra.mxu0 %v733
        %813 = vmatpush.msra.mxu0 %v731
        %814 = vmatpush.msra.mxu0 %v729
        %815 = vmatpush.msra.mxu0 %v727
        %816 = vmatpush.msra.mxu0 %v725
        %817 = vmatpush.msra.mxu0 %v723
        %818 = vmatpush.msra.mxu0 %v721
        %819 = vmatpush.msra.mxu0 %v719
        %820 = vmatpush.msra.mxu0 %v717
        %821 = vmatpush.msra.mxu0 %v715
        %822 = vmatpush.msra.mxu0 %v713
        %823 = vmatpush.msra.mxu0 %v711
        %824 = vmatpush.msra.mxu0 %v709
        %825 = vmatmul.f32.gmra.mxu0 %v345
        %v826 = vpop.f32.mrf.mxu0
        %v827 = vadd.f32 %v804, %v826
        %828 = vmatmul.f32.gmra.mxu0 %v348
        %v829 = vpop.f32.mrf.mxu0
        %v830 = vadd.f32 %v807, %v829
        %831 = vdwg.mxu0
        %v832 = vadd.f32 %v671, %v781
        %v833 = vadd.f32 %v672, %v827
        %v834 = vadd.f32 %v673, %v784
        %v835 = vadd.f32 %v674, %v830
        %836 = vst [vmem:[%s250] sm:$0xff] %v832
        %837 = vst [vmem:[%s250 + $0x8] sm:$0xff] %v833
        %838 = vst [vmem:[%s250 + $0x10] sm:$0xff] %v834
        %839 = vst [vmem:[%s250 + $0x18] sm:$0xff] %v835
        %s840 = sand.u32 %s135, 1
        %s841 = scalar_lea.sflag [#allocation4], %s840
        %s842 = sand.u32 %s135, 1
        %s843 = smul.addr %s842, 32
        %s844 = scalar_lea.vmem [#allocation7], %s843
        // Predicated region
        $region45: #{tpu_custom_call.1} parent=35 // pred_check
          %p845 = pneg %p145
        $region46: #{tpu_custom_call.1} parent=35 // pred_check_branch
          %847 = sbr.rel (%p845) target = $region48
        $region47: #{tpu_custom_call.1} parent=35 // pred_region
          %s848 = smul.u32 2, %s27
          %850 = vsyncadd %s841, 0
          %s851 = smul.addr %s26, 8
          %s852 = sadd.s32 %s848, %s851
          %s853 = smul.addr %s852, 8
          %s854 = scalar_lea.hbm %s4, %s853
          %s855 = sshll.u32 %s844, 4
          %s856 = int_to_ptr.vmem [resolvable:$true] %s855
          %s857 = sshll.u32 %s854, 4
          %s858 = int_to_ptr.hbm [resolvable:$true] %s857
          %863 = dma.vmem_to_hbm [thread:$0]  %s856, 512, %s858, %s841, 256, 512, 16
        $region48: #{tpu_custom_call.1} parent=35 // pred_fallthru
          _
      $region36: #{tpu_custom_call.1} parent=5 // pred_fallthru
        _
      %p864 = scmp.le.s32.totalorder 2, %s17
      // Predicated region
      $region49: #{tpu_custom_call.1} parent=5 // pred_check
        %p865 = pneg %p864
      $region50: #{tpu_custom_call.1} parent=5 // pred_check_branch
        %867 = sbr.rel (%p865) target = $region52
      $region51: #{tpu_custom_call.1} parent=5 // pred_region
        %s868 = ssub.s32 %s17, 2
        // Predicated region
        $region53: #{tpu_custom_call.1} parent=51 // pred_check
          %p869 = pneg %p151
        $region54: #{tpu_custom_call.1} parent=51 // pred_check_branch
          %871 = sbr.rel (%p869) target = $region56
        $region55: #{tpu_custom_call.1} parent=51 // pred_region
          %s872 = sand.u32 %s136, 1
          %s873 = scalar_lea.sflag [#allocation4], %s872
          %s874 = sand.u32 %s136, 1
          %s875 = smul.addr %s874, 32
          %s876 = scalar_lea.vmem [#allocation7], %s875
          %878 = dma.done %s873, 512
        $region56: #{tpu_custom_call.1} parent=51 // pred_fallthru
          _
      $region52: #{tpu_custom_call.1} parent=5 // pred_fallthru
        _
    $region6: #{tpu_custom_call.1} parent=1 // loop_footer
      %s21 = sadd.s32 1, %s17
    $region7: #{tpu_custom_call.1} parent=1 // loop_footer_branch
      %16 = sbr.rel target = $region3
    $region8: #{tpu_custom_call.1} parent=1 // loop_exit
      _
    %879 = vsyncpa [#allocation3], 1
    %s880 = scalar_lea.sflag [#allocation3], 1
    %881 = vsyncpa %s880, 1
    %882 = vsyncpa [#allocation6], 1
    %883 = vsyncpa [#allocation4], 1
    %s884 = scalar_lea.sflag [#allocation4], 1
    %885 = vsyncpa %s884, 1

</llo_original>
